<compile_context>
chip_gen: v5e
topology: v5e:2x2
jax: 0.10.0
libtpu: 0.0.40
codegen_flags: <defaults>
</compile_context>

<pallas_src>
import functools

import jax
import jax.numpy as jnp
from jax import lax
from jax.experimental import pallas as pl
from jax.experimental.pallas import tpu as pltpu


# --------------------------------------------------------------------------- #
# Kernels
# --------------------------------------------------------------------------- #
def _rmsnorm_kernel(x_ref, w_ref, o_ref, *, eps: float):
    # x_ref: (TM, D) rows tile; w_ref: (1, D) resident f32 weight; o_ref: (TM, D).
    x = x_ref[...].astype(jnp.float32)
    var = jnp.mean(x * x, axis=-1, keepdims=True)      # XLU cross-lane reduce
    inv = lax.rsqrt(var + jnp.float32(eps))             # EUP rsqrt (free slot)
    # TODO(synk): on v7x (higher HBM BW) fold w*inv into a bf16 scale and do the
    # final multiply in packed bf16 to keep the VALU slot from binding.
    o_ref[...] = (w_ref[...] * (x * inv)).astype(o_ref.dtype)


def _rmsnorm_packed_kernel(x_ref, w_ref, bd_ref, o_ref, *, eps: float, inv_d: float):
    # Lane-dense path for D < 128: each 128-lane row holds P = 128//D feature
    # vectors. bd_ref is a (128, 128) block-diagonal ones matrix; the MXU matmul
    # gives every lane the sum-of-squares of its own D-lane segment.
    x = x_ref[...].astype(jnp.float32)
    xsq = x * x
    seg = jnp.dot(xsq, bd_ref[...],
                  precision=lax.Precision.HIGHEST,       # keep f32 accuracy on MXU
                  preferred_element_type=jnp.float32)    # (TM, 128) per-segment sums
    inv = lax.rsqrt(seg * jnp.float32(inv_d) + jnp.float32(eps))
    o_ref[...] = (w_ref[...] * (x * inv)).astype(o_ref.dtype)


# --------------------------------------------------------------------------- #
# Tiling / VMEM heuristics
# --------------------------------------------------------------------------- #
def _round_up(x: int, m: int) -> int:
    return ((x + m - 1) // m) * m


def _vmem_budget_and_limit() -> tuple[int, int]:
    """Generation-aware (tiling budget, vmem_limit_bytes)."""
    cap = None
    try:
        info = pltpu.get_tpu_info()
        cap = int(getattr(info, "vmem_capacity_bytes", 0)) or None
    except Exception:
        cap = None
    if cap is None:
        cap = 64 * 1024 * 1024                    # conservative: v7x per-TC VMEM
    if cap >= 100 * 1024 * 1024:                  # v5e / v6e: 128 MiB VMEM
        return 56 * 1024 * 1024, 64 * 1024 * 1024
    return 28 * 1024 * 1024, 40 * 1024 * 1024     # v7x: 64 MiB per TensorCore


def _choose_row_tile(n_rows: int, d: int, dtype, budget_bytes: int) -> int:
    """Large, dtype-aware row tile targeting ~4 MiB input buffers within budget."""
    itemsize = jnp.dtype(dtype).itemsize
    packing = max(1, 4 // itemsize)               # 1 f32, 2 bf16, 4 int8/fp8
    min_tile = 8 * packing                        # native packed sublane multiple

    # Per-row footprint at a given tile: double-buffered input + output in
    # `dtype` (2 + 2 buffers) plus roughly two f32 temporaries in the body.
    bytes_per_row = d * (4 * itemsize + 2 * 4)
    max_rows_by_vmem = max(min_tile, budget_bytes // max(bytes_per_row, 1))

    # Target ~4 MiB per input tile: amortizes per-grid-step overhead and sits
    # well past the ~1 MiB class where streaming kernels approach HBM roofline.
    target_rows = max(min_tile, (4 * 1024 * 1024) // max(d * itemsize, 1))

    tile = min(target_rows, max_rows_by_vmem)

    if n_rows >= 4 * min_tile:
        # Keep at least 2 grid steps so both v7x TensorCores get work.
        half = max(min_tile, (n_rows // 2) // min_tile * min_tile)
        tile = min(tile, half)
    else:
        tile = min(tile, _round_up(n_rows, min_tile))

    tile = max(min_tile, (tile // min_tile) * min_tile)
    return int(tile)


# --------------------------------------------------------------------------- #
# Wrapper
# --------------------------------------------------------------------------- #
def rmsnorm(hidden_states: jax.Array, weight: jax.Array, eps: float,
            *, row_tile: int | None = None,
            min_pallas_elements: int = 1 << 20) -> jax.Array:
    """RMSNorm over the last axis, scaled by `weight` (dim,). Matches T5LayerNorm."""
    orig_shape = hidden_states.shape
    D = orig_shape[-1]
    n_rows = 1
    for s in orig_shape[:-1]:
        n_rows *= int(s)

    # Small-size fast path: a Pallas launch + DMA setup dominates at tiny sizes;
    # let XLA fuse the plain expression instead.
    if n_rows * D < min_pallas_elements or n_rows < 8:
        x32 = hidden_states.astype(jnp.float32)
        var = jnp.mean(x32 * x32, axis=-1, keepdims=True)
        out = weight.astype(jnp.float32) * (x32 * lax.rsqrt(var + jnp.float32(eps)))
        return out.astype(hidden_states.dtype)

    x2d = hidden_states.reshape(n_rows, D)
    w_f32 = weight.astype(jnp.float32)            # cast tiny weight once, not per step
    itemsize = jnp.dtype(hidden_states.dtype).itemsize
    budget, vmem_limit = _vmem_budget_and_limit()

    # Lane-dense packing for small feature dims: pack P = 128//D feature vectors
    # per 128-lane row so both HBM DMAs and vector loads/stores use all lanes.
    packed = (D < 128) and (128 % D == 0) and (n_rows % (128 // D) == 0)
    if packed:
        P = 128 // D
        d_eff = 128
        rows_eff = n_rows // P
        x_eff = x2d.reshape(rows_eff, d_eff)
        w_eff = jnp.tile(w_f32, P).reshape(1, d_eff)
        seg = jnp.arange(d_eff, dtype=jnp.int32) // D
        block_diag = (seg[:, None] == seg[None, :]).astype(jnp.float32)
    else:
        d_eff = D
        rows_eff = n_rows
        x_eff = x2d
        w_eff = w_f32.reshape(1, D)

    if row_tile is None:
        row_tile = _choose_row_tile(rows_eff, d_eff, hidden_states.dtype, budget)

    grid = (pl.cdiv(rows_eff, row_tile),)         # ragged final block masked by Pallas

    cost = pl.CostEstimate(
        flops=4 * n_rows * D,
        transcendentals=n_rows,
        bytes_accessed=2 * n_rows * D * itemsize + D * 4,
    )

    if packed:
        kernel = functools.partial(_rmsnorm_packed_kernel, eps=eps, inv_d=1.0 / D)
        in_specs = [
            pl.BlockSpec((row_tile, d_eff), lambda i: (i, 0)),   # packed x rows
            pl.BlockSpec((1, d_eff), lambda i: (0, 0)),          # tiled weight (resident)
            pl.BlockSpec((d_eff, d_eff), lambda i: (0, 0)),      # block-diag ones (resident)
        ]
        args = (x_eff, w_eff, block_diag)
    else:
        kernel = functools.partial(_rmsnorm_kernel, eps=eps)
        in_specs = [
            pl.BlockSpec((row_tile, d_eff), lambda i: (i, 0)),   # x rows tile
            pl.BlockSpec((1, d_eff), lambda i: (0, 0)),          # weight (resident)
        ]
        args = (x_eff, w_eff)

    out_eff = pl.pallas_call(
        kernel,
        out_shape=jax.ShapeDtypeStruct((rows_eff, d_eff), hidden_states.dtype),
        grid_spec=pltpu.PrefetchScalarGridSpec(
            num_scalar_prefetch=0,
            grid=grid,
            in_specs=in_specs,
            out_specs=pl.BlockSpec((row_tile, d_eff), lambda i: (i, 0)),
        ),
        compiler_params=pltpu.CompilerParams(
            dimension_semantics=("parallel",),    # megacore sharding on v7x
            vmem_limit_bytes=vmem_limit,
        ),
        cost_estimate=cost,
    )(*args)

    return out_eff.reshape(orig_shape)


def _reference(x, weight, eps):
    x32 = x.astype(jnp.float32)
    var = jnp.mean(x32 * x32, axis=-1, keepdims=True)
    return (weight.astype(jnp.float32) * (x32 * lax.rsqrt(var + eps))).astype(x.dtype)


if __name__ == "__main__":
    eps = 1e-6
    key = jax.random.PRNGKey(0)
    k1, k2, k3, k4, k5, kw = jax.random.split(key, 6)

    # Case 1: module's nominal small shape (batch, seq, dim) = (2, 8, 32) -> fast path.
    dim = 32
    x1 = jax.random.normal(k1, (2, 8, dim), dtype=jnp.float32)
    w = jnp.ones((dim,), dtype=jnp.float32)       # nn.Parameter(torch.ones(dim))
    out1 = jax.block_until_ready(rmsnorm(x1, w, eps))
    assert out1.shape == x1.shape
    assert jnp.allclose(out1, _reference(x1, w, eps), atol=1e-5, rtol=1e-5), "case 1"

    # Case 2: ragged row count (3*5 rows) -> fast path, no padding anywhere.
    x2 = jax.random.normal(k2, (3, 5, dim), dtype=jnp.float32)
    out2 = jax.block_until_ready(rmsnorm(x2, w, eps))
    assert jnp.allclose(out2, _reference(x2, w, eps), atol=1e-5, rtol=1e-5), "case 2"

    # Case 3: force the Pallas lane-dense packed path (D=32 -> 4 rows per 128 lanes).
    x3 = jax.random.normal(k3, (4, 256, dim), dtype=jnp.float32)
    w3 = (1.0 + 0.1 * jax.random.normal(kw, (dim,))).astype(jnp.float32)
    out3 = jax.block_until_ready(rmsnorm(x3, w3, eps, min_pallas_elements=0))
    assert jnp.allclose(out3, _reference(x3, w3, eps), atol=5e-5, rtol=5e-5), "case 3"

    # Case 4: force the unpacked Pallas path (D=256 >= 128), grid of 2 steps.
    x4 = jax.random.normal(k4, (2, 64, 256), dtype=jnp.float32)
    w4 = jnp.ones((256,), dtype=jnp.float32)
    out4 = jax.block_until_ready(rmsnorm(x4, w4, eps, min_pallas_elements=0))
    assert jnp.allclose(out4, _reference(x4, w4, eps), atol=1e-5, rtol=1e-5), "case 4"

    # Case 5: ragged row count through the Pallas path (partial final block masked).
    x5 = jax.random.normal(k5, (3, 41, 256), dtype=jnp.float32)
    out5 = jax.block_until_ready(rmsnorm(x5, w4, eps, min_pallas_elements=0))
    assert jnp.allclose(out5, _reference(x5, w4, eps), atol=1e-5, rtol=1e-5), "case 5"

    print("KERNEL_OK")
</pallas_src>

<mosaic_0001>
module attributes {stable_mosaic.version = 11 : i64} {
  func.func @_rmsnorm_packed_kernel(%arg0: i32, %arg1: memref<128x128xf32, #tpu.memory_space<vmem>>, %arg2: memref<1x128xf32, #tpu.memory_space<vmem>>, %arg3: memref<128x128xf32, #tpu.memory_space<vmem>>, %arg4: memref<128x128xf32, #tpu.memory_space<vmem>>) attributes {dimension_semantics = [#tpu.dimension_semantics<parallel>], iteration_bounds = array<i64: 2>, scalar_prefetch = 0 : i64, scratch_operands = 0 : i64, tpu.core_type = #tpu.core_type<tc>, window_params = [{transform_indices = @transform_0, window_bounds = array<i64: 128, 128>}, {pipeline_mode = #tpu.pipeline_mode<synchronous>, transform_indices = @transform_1, window_bounds = array<i64: 1, 128>}, {pipeline_mode = #tpu.pipeline_mode<synchronous>, transform_indices = @transform_2, window_bounds = array<i64: 128, 128>}, {transform_indices = @transform_3, window_bounds = array<i64: 128, 128>}]} {
    %c0 = arith.constant 0 : index
    %c0_0 = arith.constant 0 : index
    %0 = vector.load %arg1[%c0, %c0_0] : memref<128x128xf32, #tpu.memory_space<vmem>>, vector<128x128xf32>
    %1 = arith.mulf %0, %0 : vector<128x128xf32>
    %c0_1 = arith.constant 0 : index
    %c0_2 = arith.constant 0 : index
    %2 = vector.load %arg3[%c0_1, %c0_2] : memref<128x128xf32, #tpu.memory_space<vmem>>, vector<128x128xf32>
    %cst = arith.constant dense<0.000000e+00> : vector<128x128xf32>
    %3 = tpu.matmul %1, %2, %cst {dimension_numbers = #tpu.dot_dimension_numbers<[1], [0], [0], [1], [0, 0, 1, 1], [], []>, precision = #tpu.contract_precision<fp32>} : vector<128x128xf32>, vector<128x128xf32>, vector<128x128xf32> -> vector<128x128xf32>
    %cst_3 = arith.constant 3.125000e-02 : f32
    %4 = vector.broadcast %cst_3 : f32 to vector<128x128xf32>
    %5 = arith.mulf %3, %4 : vector<128x128xf32>
    %cst_4 = arith.constant 9.99999997E-7 : f32
    %6 = vector.broadcast %cst_4 : f32 to vector<128x128xf32>
    %7 = arith.addf %5, %6 : vector<128x128xf32>
    %8 = math.rsqrt %7 : vector<128x128xf32>
    %c0_5 = arith.constant 0 : index
    %c0_6 = arith.constant 0 : index
    %9 = vector.load %arg2[%c0_5, %c0_6] : memref<1x128xf32, #tpu.memory_space<vmem>>, vector<1x128xf32>
    %10 = arith.mulf %0, %8 : vector<128x128xf32>
    %11 = vector.broadcast %9 : vector<1x128xf32> to vector<128x128xf32>
    %12 = arith.mulf %11, %10 : vector<128x128xf32>
    %c0_7 = arith.constant 0 : index
    %c0_8 = arith.constant 0 : index
    %13 = vector.load %arg4[%c0_7, %c0_8] : memref<128x128xf32, #tpu.memory_space<vmem>>, vector<128x128xf32>
    tpu.vector_store %arg4[%c0_7, %c0_8], %12 {strides = array<i32>} : memref<128x128xf32, #tpu.memory_space<vmem>>, vector<128x128xf32>,
    return
  }
  func.func @transform_0(%arg0: i32) -> (i32, i32) {
    %c0_i32 = arith.constant 0 : i32
    %c0_i32_0 = arith.constant 0 : i32
    return %arg0, %c0_i32 : i32, i32
  }
  func.func @transform_1(%arg0: i32) -> (i32, i32) {
    %c0_i32 = arith.constant 0 : i32
    %c0_i32_0 = arith.constant 0 : i32
    %c0_i32_1 = arith.constant 0 : i32
    return %c0_i32, %c0_i32_0 : i32, i32
  }
  func.func @transform_2(%arg0: i32) -> (i32, i32) {
    %c0_i32 = arith.constant 0 : i32
    %c0_i32_0 = arith.constant 0 : i32
    %c0_i32_1 = arith.constant 0 : i32
    return %c0_i32, %c0_i32_0 : i32, i32
  }
  func.func @transform_3(%arg0: i32) -> (i32, i32) {
    %c0_i32 = arith.constant 0 : i32
    %c0_i32_0 = arith.constant 0 : i32
    return %arg0, %c0_i32 : i32, i32
  }
}

</mosaic_0001>

<llo_original>
// kernel: tpu_custom_call.1
$region0: #{tpu_custom_call.1}
  #allocation0 [shape = 'u32[]', space=smem, size = 0x4, offset = 0x4, fixed_abs, tag = 'smem constant byte address 0x4 - core index']
  #allocation1 [shape = 'u32[72,128]{1,0:T(1,128)}', space=vmem, size = 0x9000, scoped, tag = 'internal scratch']
  %s0 = inlined_call_operand.hbm [shape: f32[256,128], index: 0, kind: input, shape index: {}]
  %s1 = inlined_call_operand.hbm [shape: f32[1,128], index: 1, kind: input, shape index: {}]
  %s2 = inlined_call_operand.hbm [shape: f32[128,128], index: 2, kind: input, shape index: {}]
  %s3 = inlined_call_operand.hbm [shape: f32[256,128], index: 3, kind: output, shape index: {}]
  %s4 = sld [smem:[#allocation0]]
  $region57: #{tpu_custom_call.1} parent=0
    _
  %s6 = ssub.s32 1, %s4
  %s7 = scalar_select 0, %s6, %s4
  $region1: #{tpu_custom_call.1} parent=0
    #allocation2 [shape = 'u8[131072]{0}', space=vmem, size = 0x20000, scoped, tag = 'input window, operand 0']
    #allocation3 [shape = 's32[2]{0}', space=sflag, size = 0x8, scoped, tag = 'scoped memory for tpu_custom_call.1']
    #allocation4 [shape = 's32[2]{0}', space=sflag, size = 0x8, scoped, tag = 'scoped memory for tpu_custom_call.1']
    #allocation5 [shape = 'u8[512]{0}', space=vmem, size = 0x400, scoped, tag = 'input window, operand 1, single buffered']
    #allocation6 [shape = 's32[1]{0}', space=sflag, size = 0x4, scoped, tag = 'scoped memory for tpu_custom_call.1']
    #allocation7 [shape = 'u8[65536]{0}', space=vmem, size = 0x10000, scoped, tag = 'input window, operand 2, single buffered']
    #allocation8 [shape = 'u8[131072]{0}', space=vmem, size = 0x20000, scoped, tag = 'output window, operand 0']
    %8 = vsyncpa [#allocation3], 0
    %s9 = scalar_lea.sflag [#allocation3], 1
    %10 = vsyncpa %s9, 0
    %11 = vsyncpa [#allocation6], 0
    %12 = vsyncpa [#allocation4], 0
    %s13 = scalar_lea.sflag [#allocation4], 1
    %14 = vsyncpa %s13, 0
    loop: start=0, step=1, limit=4
    $region2: #{tpu_custom_call.1} parent=1 // loop_pre_header
      _
    $region3: #{tpu_custom_call.1} parent=1 // loop_header
      %s16 = sphi 0, %s20
      %p17 = scmp.ge.s32.totalorder %s16, 4
      %s26 = sphi 0, %s28
      %s29 = sphi 0, %s26
      %s30 = sphi 0, %s29
      %s46 = sphi 0, %s30
      %s50 = sphi 0, %s50
      %s52 = sphi 0, %s50
      %s53 = sphi 0, %s52
      %s67 = sphi 0, %s53
      %s71 = sphi 0, %s71
      %s73 = sphi 0, %s71
      %s74 = sphi 0, %s73
      %s88 = sphi 0, %s74
      %s94 = sphi 0, %s96
      %s97 = sphi 0, %s94
      %s98 = sphi 0, %s97
      %s114 = sphi 0, %s98
    $region4: #{tpu_custom_call.1} parent=1 // loop_header_branch
      %19 = sbr.rel (%p17) target = $region8
    $region5: #{tpu_custom_call.1} parent=1 // loop_body
      %s21 = ssub.s32 %s16, 1
      %s22 = ssub.s32 %s16, 2
      %s23 = sadd.s32 %s16, 1
      %s24 = ssub.s32 %s16, %s23
      %p25 = scmp.eq.s32.totalorder %s24, 0
      %s27 = sadd.s32 %s26, 1
      %s28 = scalar_select %p25, %s26, %s27
      %p31 = pneg %p25
      %p32 = scmp.eq.s32.totalorder %s16, 1
      %p33 = por %p31, %p32
      %p34 = scmp.ne.s32.totalorder %s26, %s29
      %p35 = scmp.eq.s32.totalorder %s16, 0
      %p36 = por %p34, %p35
      %p37 = scmp.ne.s32.totalorder %s26, %s29
      %p38 = scmp.eq.s32.totalorder %s21, 1
      %p39 = por %p37, %p38
      %p40 = scmp.ne.s32.totalorder %s29, %s30
      %p41 = scmp.eq.s32.totalorder %s21, 0
      %p42 = por %p40, %p41
      %p43 = scmp.ne.s32.totalorder %s29, %s30
      %p44 = scmp.eq.s32.totalorder %s22, 1
      %p45 = por %p43, %p44
      %p47 = scmp.ne.s32.totalorder %s30, %s46
      %p48 = scmp.eq.s32.totalorder %s22, 0
      %p49 = por %p47, %p48
      %s51 = sadd.s32 %s50, 1
      %p54 = scmp.eq.s32.totalorder %s16, 1
      %p55 = scmp.ne.s32.totalorder %s50, %s52
      %p56 = scmp.eq.s32.totalorder %s16, 0
      %p57 = por %p55, %p56
      %p58 = scmp.ne.s32.totalorder %s50, %s52
      %p59 = scmp.eq.s32.totalorder %s21, 1
      %p60 = por %p58, %p59
      %p61 = scmp.ne.s32.totalorder %s52, %s53
      %p62 = scmp.eq.s32.totalorder %s21, 0
      %p63 = por %p61, %p62
      %p64 = scmp.ne.s32.totalorder %s52, %s53
      %p65 = scmp.eq.s32.totalorder %s22, 1
      %p66 = por %p64, %p65
      %p68 = scmp.ne.s32.totalorder %s53, %s67
      %p69 = scmp.eq.s32.totalorder %s22, 0
      %p70 = por %p68, %p69
      %s72 = sadd.s32 %s71, 1
      %p75 = scmp.eq.s32.totalorder %s16, 1
      %p76 = scmp.ne.s32.totalorder %s71, %s73
      %p77 = scmp.eq.s32.totalorder %s16, 0
      %p78 = por %p76, %p77
      %p79 = scmp.ne.s32.totalorder %s71, %s73
      %p80 = scmp.eq.s32.totalorder %s21, 1
      %p81 = por %p79, %p80
      %p82 = scmp.ne.s32.totalorder %s73, %s74
      %p83 = scmp.eq.s32.totalorder %s21, 0
      %p84 = por %p82, %p83
      %p85 = scmp.ne.s32.totalorder %s73, %s74
      %p86 = scmp.eq.s32.totalorder %s22, 1
      %p87 = por %p85, %p86
      %p89 = scmp.ne.s32.totalorder %s74, %s88
      %p90 = scmp.eq.s32.totalorder %s22, 0
      %p91 = por %p89, %p90
      %s92 = ssub.s32 %s16, %s23
      %p93 = scmp.eq.s32.totalorder %s92, 0
      %s95 = sadd.s32 %s94, 1
      %s96 = scalar_select %p93, %s94, %s95
      %p99 = pneg %p93
      %p100 = scmp.eq.s32.totalorder %s16, 1
      %p101 = por %p99, %p100
      %p102 = scmp.ne.s32.totalorder %s94, %s97
      %p103 = scmp.eq.s32.totalorder %s16, 0
      %p104 = por %p102, %p103
      %p105 = scmp.ne.s32.totalorder %s94, %s97
      %p106 = scmp.eq.s32.totalorder %s21, 1
      %p107 = por %p105, %p106
      %p108 = scmp.ne.s32.totalorder %s97, %s98
      %p109 = scmp.eq.s32.totalorder %s21, 0
      %p110 = por %p108, %p109
      %p111 = scmp.ne.s32.totalorder %s97, %s98
      %p112 = scmp.eq.s32.totalorder %s22, 1
      %p113 = por %p111, %p112
      %p115 = scmp.ne.s32.totalorder %s98, %s114
      %p116 = scmp.eq.s32.totalorder %s22, 0
      %p117 = por %p115, %p116
      %p118 = scmp.le.s32.totalorder 1, %s16
      %p119 = scmp.lt.s32.totalorder %s16, 3
      %p120 = pnand %p118, %p119
      %p121 = pneg %p120
      // Predicated region
      $region9: #{tpu_custom_call.1} parent=5 // pred_check
        _
      $region10: #{tpu_custom_call.1} parent=5 // pred_check_branch
        %123 = sbr.rel (%p120) target = $region12
      $region11: #{tpu_custom_call.1} parent=5 // pred_region
        %s124 = ssub.s32 %s16, 1
        // Predicated region
        $region13: #{tpu_custom_call.1} parent=11 // pred_check
          %p125 = pneg %p63
        $region14: #{tpu_custom_call.1} parent=11 // pred_check_branch
          %127 = sbr.rel (%p125) target = $region16
        $region15: #{tpu_custom_call.1} parent=11 // pred_region
          %129 = vsyncadd [#allocation6], 0
          %s131 = sshll.u32 %s1, 4
          %s132 = int_to_ptr.hbm [resolvable:$true] %s131
          %s133 = sshll.u32 [#allocation5], 4
          %s134 = int_to_ptr.vmem [resolvable:$true] %s133
          %136 = dma.hbm_to_vmem [thread:$0]  %s132, 16, %s134, [#allocation6]
        $region16: #{tpu_custom_call.1} parent=11 // pred_fallthru
          _
        // Predicated region
        $region17: #{tpu_custom_call.1} parent=11 // pred_check
          %p137 = pneg %p84
        $region18: #{tpu_custom_call.1} parent=11 // pred_check_branch
          %139 = sbr.rel (%p137) target = $region20
        $region19: #{tpu_custom_call.1} parent=11 // pred_region
          %141 = vsyncadd [#allocation6], 0
          %s142 = sshll.u32 %s2, 4
          %s143 = int_to_ptr.hbm [resolvable:$true] %s142
          %s144 = sshll.u32 [#allocation7], 4
          %s145 = int_to_ptr.vmem [resolvable:$true] %s144
          %150 = dma.hbm_to_vmem [thread:$0]  %s143, 2048, %s145, [#allocation6], 128, 128, 8
        $region20: #{tpu_custom_call.1} parent=11 // pred_fallthru
          _
      $region12: #{tpu_custom_call.1} parent=5 // pred_fallthru
        _
      %p151 = scmp.lt.s32.totalorder %s16, 2
      // Predicated region
      $region21: #{tpu_custom_call.1} parent=5 // pred_check
        %p152 = pneg %p151
      $region22: #{tpu_custom_call.1} parent=5 // pred_check_branch
        %154 = sbr.rel (%p152) target = $region24
      $region23: #{tpu_custom_call.1} parent=5 // pred_region
        // Predicated region
        $region25: #{tpu_custom_call.1} parent=23 // pred_check
          %p155 = pneg %p36
        $region26: #{tpu_custom_call.1} parent=23 // pred_check_branch
          %157 = sbr.rel (%p155) target = $region28
        $region27: #{tpu_custom_call.1} parent=23 // pred_region
          %s158 = sand.u32 %s26, 1
          %s159 = scalar_lea.sflag [#allocation3], %s158
          %s160 = sand.u32 %s26, 1
          %s161 = smul.addr %s160, 128
          %s162 = scalar_lea.vmem [#allocation2], %s161
          %s163 = smul.u32 16, %s16
          %165 = vsyncadd %s159, 0
          %s166 = smul.addr %s163, 8
          %s167 = scalar_lea.hbm %s0, %s166
          %s168 = sshll.u32 %s167, 4
          %s169 = int_to_ptr.hbm [resolvable:$true] %s168
          %s170 = sshll.u32 %s162, 4
          %s171 = int_to_ptr.vmem [resolvable:$true] %s170
          %176 = dma.hbm_to_vmem [thread:$0]  %s169, 2048, %s171, %s159, 128, 128, 8
        $region28: #{tpu_custom_call.1} parent=23 // pred_fallthru
          _
      $region24: #{tpu_custom_call.1} parent=5 // pred_fallthru
        _
      %p177 = scmp.le.s32.totalorder 1, %s16
      %p178 = scmp.lt.s32.totalorder %s16, 3
      %p179 = pnand %p177, %p178
      %p180 = pneg %p179
      // Predicated region
      $region29: #{tpu_custom_call.1} parent=5 // pred_check
        _
      $region30: #{tpu_custom_call.1} parent=5 // pred_check_branch
        %182 = sbr.rel (%p179) target = $region32
      $region31: #{tpu_custom_call.1} parent=5 // pred_region
        %s183 = ssub.s32 %s16, 1
        %s184 = sand.u32 %s29, 1
        %s185 = scalar_lea.sflag [#allocation3], %s184
        %s186 = sand.u32 %s29, 1
        %s187 = smul.addr %s186, 128
        %s188 = scalar_lea.vmem [#allocation2], %s187
        // Predicated region
        $region33: #{tpu_custom_call.1} parent=31 // pred_check
          %p189 = pneg %p42
        $region34: #{tpu_custom_call.1} parent=31 // pred_check_branch
          %191 = sbr.rel (%p189) target = $region36
        $region35: #{tpu_custom_call.1} parent=31 // pred_region
          %193 = dma.done %s185, 2048
        $region36: #{tpu_custom_call.1} parent=31 // pred_fallthru
          _
        // Predicated region
        $region37: #{tpu_custom_call.1} parent=31 // pred_check
          %p194 = pneg %p63
        $region38: #{tpu_custom_call.1} parent=31 // pred_check_branch
          %196 = sbr.rel (%p194) target = $region40
        $region39: #{tpu_custom_call.1} parent=31 // pred_region
          %198 = dma.done [#allocation6], 16
        $region40: #{tpu_custom_call.1} parent=31 // pred_fallthru
          _
        // Predicated region
        $region41: #{tpu_custom_call.1} parent=31 // pred_check
          %p199 = pneg %p84
        $region42: #{tpu_custom_call.1} parent=31 // pred_check_branch
          %201 = sbr.rel (%p199) target = $region44
        $region43: #{tpu_custom_call.1} parent=31 // pred_region
          %203 = dma.done [#allocation6], 2048
        $region44: #{tpu_custom_call.1} parent=31 // pred_fallthru
          _
        %s204 = sand.u32 %s29, 1
        %s205 = scalar_lea.sflag [#allocation3], %s204
        %s206 = sand.u32 %s29, 1
        %s207 = smul.addr %s206, 128
        %s208 = scalar_lea.vmem [#allocation2], %s207
        %p209 = pneg %p42
        %p210 = pneg %p39
        %p211 = pneg %p63
        %p212 = pneg %p60
        %p213 = pneg %p84
        %p214 = pneg %p81
        %p215 = pneg %p110
        %p216 = pneg %p107
        %s217 = sand.u32 %s97, 1
        %s218 = scalar_lea.sflag [#allocation4], %s217
        %s219 = sand.u32 %s97, 1
        %s220 = smul.addr %s219, 128
        %s221 = scalar_lea.vmem [#allocation8], %s220
        %s222 = smul.u32 16, %s21
        %s223 = smul.u32 16, %s21
        %v224 = vld [vmem:[%s188] sm:$0xff]
        %v225 = vld [vmem:[%s188 + $0x8] sm:$0xff]
        %v226 = vld [vmem:[%s188 + $0x10] sm:$0xff]
        %v227 = vld [vmem:[%s188 + $0x18] sm:$0xff]
        %v228 = vld [vmem:[%s188 + $0x20] sm:$0xff]
        %v229 = vld [vmem:[%s188 + $0x28] sm:$0xff]
        %v230 = vld [vmem:[%s188 + $0x30] sm:$0xff]
        %v231 = vld [vmem:[%s188 + $0x38] sm:$0xff]
        %v232 = vld [vmem:[%s188 + $0x40] sm:$0xff]
        %v233 = vld [vmem:[%s188 + $0x48] sm:$0xff]
        %v234 = vld [vmem:[%s188 + $0x50] sm:$0xff]
        %v235 = vld [vmem:[%s188 + $0x58] sm:$0xff]
        %v236 = vld [vmem:[%s188 + $0x60] sm:$0xff]
        %v237 = vld [vmem:[%s188 + $0x68] sm:$0xff]
        %v238 = vld [vmem:[%s188 + $0x70] sm:$0xff]
        %v239 = vld [vmem:[%s188 + $0x78] sm:$0xff]
        %v240 = vmul.f32 %v224, %v224
        %v241 = vmul.f32 %v225, %v225
        %v242 = vmul.f32 %v226, %v226
        %v243 = vmul.f32 %v227, %v227
        %v244 = vmul.f32 %v228, %v228
        %v245 = vmul.f32 %v229, %v229
        %v246 = vmul.f32 %v230, %v230
        %v247 = vmul.f32 %v231, %v231
        %v248 = vmul.f32 %v232, %v232
        %v249 = vmul.f32 %v233, %v233
        %v250 = vmul.f32 %v234, %v234
        %v251 = vmul.f32 %v235, %v235
        %v252 = vmul.f32 %v236, %v236
        %v253 = vmul.f32 %v237, %v237
        %v254 = vmul.f32 %v238, %v238
        %v255 = vmul.f32 %v239, %v239
        %v256 = vld [vmem:[#allocation7] sm:$0xff]
        %v257 = vld [vmem:[#allocation7 + $0x8] sm:$0xff]
        %v258 = vld [vmem:[#allocation7 + $0x10] sm:$0xff]
        %v259 = vld [vmem:[#allocation7 + $0x18] sm:$0xff]
        %v260 = vld [vmem:[#allocation7 + $0x20] sm:$0xff]
        %v261 = vld [vmem:[#allocation7 + $0x28] sm:$0xff]
        %v262 = vld [vmem:[#allocation7 + $0x30] sm:$0xff]
        %v263 = vld [vmem:[#allocation7 + $0x38] sm:$0xff]
        %v264 = vld [vmem:[#allocation7 + $0x40] sm:$0xff]
        %v265 = vld [vmem:[#allocation7 + $0x48] sm:$0xff]
        %v266 = vld [vmem:[#allocation7 + $0x50] sm:$0xff]
        %v267 = vld [vmem:[#allocation7 + $0x58] sm:$0xff]
        %v268 = vld [vmem:[#allocation7 + $0x60] sm:$0xff]
        %v269 = vld [vmem:[#allocation7 + $0x68] sm:$0xff]
        %v270 = vld [vmem:[#allocation7 + $0x70] sm:$0xff]
        %v271 = vld [vmem:[#allocation7 + $0x78] sm:$0xff]
        %v272 = vand.u32 %v271, 4294901760
        %273 = vmatpush.msra.mxu0 %v272
        %v274 = vand.u32 %v270, 4294901760
        %275 = vmatpush.msra.mxu0 %v274
        %v276 = vand.u32 %v269, 4294901760
        %277 = vmatpush.msra.mxu0 %v276
        %v278 = vand.u32 %v268, 4294901760
        %279 = vmatpush.msra.mxu0 %v278
        %v280 = vand.u32 %v267, 4294901760
        %281 = vmatpush.msra.mxu0 %v280
        %v282 = vand.u32 %v266, 4294901760
        %283 = vmatpush.msra.mxu0 %v282
        %v284 = vand.u32 %v265, 4294901760
        %285 = vmatpush.msra.mxu0 %v284
        %v286 = vand.u32 %v264, 4294901760
        %287 = vmatpush.msra.mxu0 %v286
        %v288 = vand.u32 %v263, 4294901760
        %289 = vmatpush.msra.mxu0 %v288
        %v290 = vand.u32 %v262, 4294901760
        %291 = vmatpush.msra.mxu0 %v290
        %v292 = vand.u32 %v261, 4294901760
        %293 = vmatpush.msra.mxu0 %v292
        %v294 = vand.u32 %v260, 4294901760
        %295 = vmatpush.msra.mxu0 %v294
        %v296 = vand.u32 %v259, 4294901760
        %297 = vmatpush.msra.mxu0 %v296
        %v298 = vand.u32 %v258, 4294901760
        %299 = vmatpush.msra.mxu0 %v298
        %v300 = vand.u32 %v257, 4294901760
        %301 = vmatpush.msra.mxu0 %v300
        %v302 = vand.u32 %v256, 4294901760
        %303 = vmatpush.msra.mxu0 %v302
        %v304 = vand.u32 %v240, 4294901760
        %v305 = vsub.f32 %v240, %v304
        %v306 = vand.u32 %v305, 4294901760
        %v307 = vsub.f32 %v305, %v306
        %v308 = vand.u32 %v307, 4294901760
        %309 = vmatmul.f32.gmra.mxu0 %v308
        %v310 = vpop.f32.mrf.mxu0
        %v311 = vadd.f32 0.0, %v310
        %v312 = vand.u32 %v241, 4294901760
        %v313 = vsub.f32 %v241, %v312
        %v314 = vand.u32 %v313, 4294901760
        %v315 = vsub.f32 %v313, %v314
        %v316 = vand.u32 %v315, 4294901760
        %317 = vmatmul.f32.gmra.mxu0 %v316
        %v318 = vpop.f32.mrf.mxu0
        %v319 = vadd.f32 0.0, %v318
        %v320 = vand.u32 %v242, 4294901760
        %v321 = vsub.f32 %v242, %v320
        %v322 = vand.u32 %v321, 4294901760
        %v323 = vsub.f32 %v321, %v322
        %v324 = vand.u32 %v323, 4294901760
        %325 = vmatmul.f32.gmra.mxu0 %v324
        %v326 = vpop.f32.mrf.mxu0
        %v327 = vadd.f32 0.0, %v326
        %v328 = vand.u32 %v243, 4294901760
        %v329 = vsub.f32 %v243, %v328
        %v330 = vand.u32 %v329, 4294901760
        %v331 = vsub.f32 %v329, %v330
        %v332 = vand.u32 %v331, 4294901760
        %333 = vmatmul.f32.gmra.mxu0 %v332
        %v334 = vpop.f32.mrf.mxu0
        %v335 = vadd.f32 0.0, %v334
        %v336 = vand.u32 %v244, 4294901760
        %v337 = vsub.f32 %v244, %v336
        %v338 = vand.u32 %v337, 4294901760
        %v339 = vsub.f32 %v337, %v338
        %v340 = vand.u32 %v339, 4294901760
        %341 = vmatmul.f32.gmra.mxu0 %v340
        %v342 = vpop.f32.mrf.mxu0
        %v343 = vadd.f32 0.0, %v342
        %v344 = vand.u32 %v245, 4294901760
        %v345 = vsub.f32 %v245, %v344
        %v346 = vand.u32 %v345, 4294901760
        %v347 = vsub.f32 %v345, %v346
        %v348 = vand.u32 %v347, 4294901760
        %349 = vmatmul.f32.gmra.mxu0 %v348
        %v350 = vpop.f32.mrf.mxu0
        %v351 = vadd.f32 0.0, %v350
        %v352 = vand.u32 %v246, 4294901760
        %v353 = vsub.f32 %v246, %v352
        %v354 = vand.u32 %v353, 4294901760
        %v355 = vsub.f32 %v353, %v354
        %v356 = vand.u32 %v355, 4294901760
        %357 = vmatmul.f32.gmra.mxu0 %v356
        %v358 = vpop.f32.mrf.mxu0
        %v359 = vadd.f32 0.0, %v358
        %v360 = vand.u32 %v247, 4294901760
        %v361 = vsub.f32 %v247, %v360
        %v362 = vand.u32 %v361, 4294901760
        %v363 = vsub.f32 %v361, %v362
        %v364 = vand.u32 %v363, 4294901760
        %365 = vmatmul.f32.gmra.mxu0 %v364
        %v366 = vpop.f32.mrf.mxu0
        %v367 = vadd.f32 0.0, %v366
        %v368 = vand.u32 %v248, 4294901760
        %v369 = vsub.f32 %v248, %v368
        %v370 = vand.u32 %v369, 4294901760
        %v371 = vsub.f32 %v369, %v370
        %v372 = vand.u32 %v371, 4294901760
        %373 = vmatmul.f32.gmra.mxu0 %v372
        %v374 = vpop.f32.mrf.mxu0
        %v375 = vadd.f32 0.0, %v374
        %v376 = vand.u32 %v249, 4294901760
        %v377 = vsub.f32 %v249, %v376
        %v378 = vand.u32 %v377, 4294901760
        %v379 = vsub.f32 %v377, %v378
        %v380 = vand.u32 %v379, 4294901760
        %381 = vmatmul.f32.gmra.mxu0 %v380
        %v382 = vpop.f32.mrf.mxu0
        %v383 = vadd.f32 0.0, %v382
        %v384 = vand.u32 %v250, 4294901760
        %v385 = vsub.f32 %v250, %v384
        %v386 = vand.u32 %v385, 4294901760
        %v387 = vsub.f32 %v385, %v386
        %v388 = vand.u32 %v387, 4294901760
        %389 = vmatmul.f32.gmra.mxu0 %v388
        %v390 = vpop.f32.mrf.mxu0
        %v391 = vadd.f32 0.0, %v390
        %v392 = vand.u32 %v251, 4294901760
        %v393 = vsub.f32 %v251, %v392
        %v394 = vand.u32 %v393, 4294901760
        %v395 = vsub.f32 %v393, %v394
        %v396 = vand.u32 %v395, 4294901760
        %397 = vmatmul.f32.gmra.mxu0 %v396
        %v398 = vpop.f32.mrf.mxu0
        %v399 = vadd.f32 0.0, %v398
        %v400 = vand.u32 %v252, 4294901760
        %v401 = vsub.f32 %v252, %v400
        %v402 = vand.u32 %v401, 4294901760
        %v403 = vsub.f32 %v401, %v402
        %v404 = vand.u32 %v403, 4294901760
        %405 = vmatmul.f32.gmra.mxu0 %v404
        %v406 = vpop.f32.mrf.mxu0
        %v407 = vadd.f32 0.0, %v406
        %v408 = vand.u32 %v253, 4294901760
        %v409 = vsub.f32 %v253, %v408
        %v410 = vand.u32 %v409, 4294901760
        %v411 = vsub.f32 %v409, %v410
        %v412 = vand.u32 %v411, 4294901760
        %413 = vmatmul.f32.gmra.mxu0 %v412
        %v414 = vpop.f32.mrf.mxu0
        %v415 = vadd.f32 0.0, %v414
        %v416 = vand.u32 %v254, 4294901760
        %v417 = vsub.f32 %v254, %v416
        %v418 = vand.u32 %v417, 4294901760
        %v419 = vsub.f32 %v417, %v418
        %v420 = vand.u32 %v419, 4294901760
        %421 = vmatmul.f32.gmra.mxu0 %v420
        %v422 = vpop.f32.mrf.mxu0
        %v423 = vadd.f32 0.0, %v422
        %v424 = vand.u32 %v255, 4294901760
        %v425 = vsub.f32 %v255, %v424
        %v426 = vand.u32 %v425, 4294901760
        %v427 = vsub.f32 %v425, %v426
        %v428 = vand.u32 %v427, 4294901760
        %429 = vmatmul.f32.gmra.mxu0 %v428
        %v430 = vpop.f32.mrf.mxu0
        %v431 = vadd.f32 0.0, %v430
        %432 = vdwg.mxu0
        %v433 = vand.u32 %v271, 4294901760
        %v434 = vsub.f32 %v271, %v433
        %v435 = vand.u32 %v434, 4294901760
        %v436 = vsub.f32 %v434, %v435
        %v437 = vand.u32 %v436, 4294901760
        %438 = vmatpush.msra.mxu0 %v437
        %v439 = vand.u32 %v270, 4294901760
        %v440 = vsub.f32 %v270, %v439
        %v441 = vand.u32 %v440, 4294901760
        %v442 = vsub.f32 %v440, %v441
        %v443 = vand.u32 %v442, 4294901760
        %444 = vmatpush.msra.mxu0 %v443
        %v445 = vand.u32 %v269, 4294901760
        %v446 = vsub.f32 %v269, %v445
        %v447 = vand.u32 %v446, 4294901760
        %v448 = vsub.f32 %v446, %v447
        %v449 = vand.u32 %v448, 4294901760
        %450 = vmatpush.msra.mxu0 %v449
        %v451 = vand.u32 %v268, 4294901760
        %v452 = vsub.f32 %v268, %v451
        %v453 = vand.u32 %v452, 4294901760
        %v454 = vsub.f32 %v452, %v453
        %v455 = vand.u32 %v454, 4294901760
        %456 = vmatpush.msra.mxu0 %v455
        %v457 = vand.u32 %v267, 4294901760
        %v458 = vsub.f32 %v267, %v457
        %v459 = vand.u32 %v458, 4294901760
        %v460 = vsub.f32 %v458, %v459
        %v461 = vand.u32 %v460, 4294901760
        %462 = vmatpush.msra.mxu0 %v461
        %v463 = vand.u32 %v266, 4294901760
        %v464 = vsub.f32 %v266, %v463
        %v465 = vand.u32 %v464, 4294901760
        %v466 = vsub.f32 %v464, %v465
        %v467 = vand.u32 %v466, 4294901760
        %468 = vmatpush.msra.mxu0 %v467
        %v469 = vand.u32 %v265, 4294901760
        %v470 = vsub.f32 %v265, %v469
        %v471 = vand.u32 %v470, 4294901760
        %v472 = vsub.f32 %v470, %v471
        %v473 = vand.u32 %v472, 4294901760
        %474 = vmatpush.msra.mxu0 %v473
        %v475 = vand.u32 %v264, 4294901760
        %v476 = vsub.f32 %v264, %v475
        %v477 = vand.u32 %v476, 4294901760
        %v478 = vsub.f32 %v476, %v477
        %v479 = vand.u32 %v478, 4294901760
        %480 = vmatpush.msra.mxu0 %v479
        %v481 = vand.u32 %v263, 4294901760
        %v482 = vsub.f32 %v263, %v481
        %v483 = vand.u32 %v482, 4294901760
        %v484 = vsub.f32 %v482, %v483
        %v485 = vand.u32 %v484, 4294901760
        %486 = vmatpush.msra.mxu0 %v485
        %v487 = vand.u32 %v262, 4294901760
        %v488 = vsub.f32 %v262, %v487
        %v489 = vand.u32 %v488, 4294901760
        %v490 = vsub.f32 %v488, %v489
        %v491 = vand.u32 %v490, 4294901760
        %492 = vmatpush.msra.mxu0 %v491
        %v493 = vand.u32 %v261, 4294901760
        %v494 = vsub.f32 %v261, %v493
        %v495 = vand.u32 %v494, 4294901760
        %v496 = vsub.f32 %v494, %v495
        %v497 = vand.u32 %v496, 4294901760
        %498 = vmatpush.msra.mxu0 %v497
        %v499 = vand.u32 %v260, 4294901760
        %v500 = vsub.f32 %v260, %v499
        %v501 = vand.u32 %v500, 4294901760
        %v502 = vsub.f32 %v500, %v501
        %v503 = vand.u32 %v502, 4294901760
        %504 = vmatpush.msra.mxu0 %v503
        %v505 = vand.u32 %v259, 4294901760
        %v506 = vsub.f32 %v259, %v505
        %v507 = vand.u32 %v506, 4294901760
        %v508 = vsub.f32 %v506, %v507
        %v509 = vand.u32 %v508, 4294901760
        %510 = vmatpush.msra.mxu0 %v509
        %v511 = vand.u32 %v258, 4294901760
        %v512 = vsub.f32 %v258, %v511
        %v513 = vand.u32 %v512, 4294901760
        %v514 = vsub.f32 %v512, %v513
        %v515 = vand.u32 %v514, 4294901760
        %516 = vmatpush.msra.mxu0 %v515
        %v517 = vand.u32 %v257, 4294901760
        %v518 = vsub.f32 %v257, %v517
        %v519 = vand.u32 %v518, 4294901760
        %v520 = vsub.f32 %v518, %v519
        %v521 = vand.u32 %v520, 4294901760
        %522 = vmatpush.msra.mxu0 %v521
        %v523 = vand.u32 %v256, 4294901760
        %v524 = vsub.f32 %v256, %v523
        %v525 = vand.u32 %v524, 4294901760
        %v526 = vsub.f32 %v524, %v525
        %v527 = vand.u32 %v526, 4294901760
        %528 = vmatpush.msra.mxu0 %v527
        %v529 = vand.u32 %v240, 4294901760
        %530 = vmatmul.f32.gmra.mxu0 %v529
        %v531 = vpop.f32.mrf.mxu0
        %v532 = vadd.f32 %v311, %v531
        %v533 = vand.u32 %v241, 4294901760
        %534 = vmatmul.f32.gmra.mxu0 %v533
        %v535 = vpop.f32.mrf.mxu0
        %v536 = vadd.f32 %v319, %v535
        %v537 = vand.u32 %v242, 4294901760
        %538 = vmatmul.f32.gmra.mxu0 %v537
        %v539 = vpop.f32.mrf.mxu0
        %v540 = vadd.f32 %v327, %v539
        %v541 = vand.u32 %v243, 4294901760
        %542 = vmatmul.f32.gmra.mxu0 %v541
        %v543 = vpop.f32.mrf.mxu0
        %v544 = vadd.f32 %v335, %v543
        %v545 = vand.u32 %v244, 4294901760
        %546 = vmatmul.f32.gmra.mxu0 %v545
        %v547 = vpop.f32.mrf.mxu0
        %v548 = vadd.f32 %v343, %v547
        %v549 = vand.u32 %v245, 4294901760
        %550 = vmatmul.f32.gmra.mxu0 %v549
        %v551 = vpop.f32.mrf.mxu0
        %v552 = vadd.f32 %v351, %v551
        %v553 = vand.u32 %v246, 4294901760
        %554 = vmatmul.f32.gmra.mxu0 %v553
        %v555 = vpop.f32.mrf.mxu0
        %v556 = vadd.f32 %v359, %v555
        %v557 = vand.u32 %v247, 4294901760
        %558 = vmatmul.f32.gmra.mxu0 %v557
        %v559 = vpop.f32.mrf.mxu0
        %v560 = vadd.f32 %v367, %v559
        %v561 = vand.u32 %v248, 4294901760
        %562 = vmatmul.f32.gmra.mxu0 %v561
        %v563 = vpop.f32.mrf.mxu0
        %v564 = vadd.f32 %v375, %v563
        %v565 = vand.u32 %v249, 4294901760
        %566 = vmatmul.f32.gmra.mxu0 %v565
        %v567 = vpop.f32.mrf.mxu0
        %v568 = vadd.f32 %v383, %v567
        %v569 = vand.u32 %v250, 4294901760
        %570 = vmatmul.f32.gmra.mxu0 %v569
        %v571 = vpop.f32.mrf.mxu0
        %v572 = vadd.f32 %v391, %v571
        %v573 = vand.u32 %v251, 4294901760
        %574 = vmatmul.f32.gmra.mxu0 %v573
        %v575 = vpop.f32.mrf.mxu0
        %v576 = vadd.f32 %v399, %v575
        %v577 = vand.u32 %v252, 4294901760
        %578 = vmatmul.f32.gmra.mxu0 %v577
        %v579 = vpop.f32.mrf.mxu0
        %v580 = vadd.f32 %v407, %v579
        %v581 = vand.u32 %v253, 4294901760
        %582 = vmatmul.f32.gmra.mxu0 %v581
        %v583 = vpop.f32.mrf.mxu0
        %v584 = vadd.f32 %v415, %v583
        %v585 = vand.u32 %v254, 4294901760
        %586 = vmatmul.f32.gmra.mxu0 %v585
        %v587 = vpop.f32.mrf.mxu0
        %v588 = vadd.f32 %v423, %v587
        %v589 = vand.u32 %v255, 4294901760
        %590 = vmatmul.f32.gmra.mxu0 %v589
        %v591 = vpop.f32.mrf.mxu0
        %v592 = vadd.f32 %v431, %v591
        %593 = vdwg.mxu0
        %v594 = vand.u32 %v271, 4294901760
        %v595 = vsub.f32 %v271, %v594
        %596 = vmatpush.msra.mxu0 %v595
        %v597 = vand.u32 %v270, 4294901760
        %v598 = vsub.f32 %v270, %v597
        %599 = vmatpush.msra.mxu0 %v598
        %v600 = vand.u32 %v269, 4294901760
        %v601 = vsub.f32 %v269, %v600
        %602 = vmatpush.msra.mxu0 %v601
        %v603 = vand.u32 %v268, 4294901760
        %v604 = vsub.f32 %v268, %v603
        %605 = vmatpush.msra.mxu0 %v604
        %v606 = vand.u32 %v267, 4294901760
        %v607 = vsub.f32 %v267, %v606
        %608 = vmatpush.msra.mxu0 %v607
        %v609 = vand.u32 %v266, 4294901760
        %v610 = vsub.f32 %v266, %v609
        %611 = vmatpush.msra.mxu0 %v610
        %v612 = vand.u32 %v265, 4294901760
        %v613 = vsub.f32 %v265, %v612
        %614 = vmatpush.msra.mxu0 %v613
        %v615 = vand.u32 %v264, 4294901760
        %v616 = vsub.f32 %v264, %v615
        %617 = vmatpush.msra.mxu0 %v616
        %v618 = vand.u32 %v263, 4294901760
        %v619 = vsub.f32 %v263, %v618
        %620 = vmatpush.msra.mxu0 %v619
        %v621 = vand.u32 %v262, 4294901760
        %v622 = vsub.f32 %v262, %v621
        %623 = vmatpush.msra.mxu0 %v622
        %v624 = vand.u32 %v261, 4294901760
        %v625 = vsub.f32 %v261, %v624
        %626 = vmatpush.msra.mxu0 %v625
        %v627 = vand.u32 %v260, 4294901760
        %v628 = vsub.f32 %v260, %v627
        %629 = vmatpush.msra.mxu0 %v628
        %v630 = vand.u32 %v259, 4294901760
        %v631 = vsub.f32 %v259, %v630
        %632 = vmatpush.msra.mxu0 %v631
        %v633 = vand.u32 %v258, 4294901760
        %v634 = vsub.f32 %v258, %v633
        %635 = vmatpush.msra.mxu0 %v634
        %v636 = vand.u32 %v257, 4294901760
        %v637 = vsub.f32 %v257, %v636
        %638 = vmatpush.msra.mxu0 %v637
        %v639 = vand.u32 %v256, 4294901760
        %v640 = vsub.f32 %v256, %v639
        %641 = vmatpush.msra.mxu0 %v640
        %v642 = vand.u32 %v240, 4294901760
        %v643 = vsub.f32 %v240, %v642
        %644 = vmatmul.f32.gmra.mxu0 %v643
        %v645 = vpop.f32.mrf.mxu0
        %v646 = vadd.f32 %v532, %v645
        %v647 = vand.u32 %v241, 4294901760
        %v648 = vsub.f32 %v241, %v647
        %649 = vmatmul.f32.gmra.mxu0 %v648
        %v650 = vpop.f32.mrf.mxu0
        %v651 = vadd.f32 %v536, %v650
        %v652 = vand.u32 %v242, 4294901760
        %v653 = vsub.f32 %v242, %v652
        %654 = vmatmul.f32.gmra.mxu0 %v653
        %v655 = vpop.f32.mrf.mxu0
        %v656 = vadd.f32 %v540, %v655
        %v657 = vand.u32 %v243, 4294901760
        %v658 = vsub.f32 %v243, %v657
        %659 = vmatmul.f32.gmra.mxu0 %v658
        %v660 = vpop.f32.mrf.mxu0
        %v661 = vadd.f32 %v544, %v660
        %v662 = vand.u32 %v244, 4294901760
        %v663 = vsub.f32 %v244, %v662
        %664 = vmatmul.f32.gmra.mxu0 %v663
        %v665 = vpop.f32.mrf.mxu0
        %v666 = vadd.f32 %v548, %v665
        %v667 = vand.u32 %v245, 4294901760
        %v668 = vsub.f32 %v245, %v667
        %669 = vmatmul.f32.gmra.mxu0 %v668
        %v670 = vpop.f32.mrf.mxu0
        %v671 = vadd.f32 %v552, %v670
        %v672 = vand.u32 %v246, 4294901760
        %v673 = vsub.f32 %v246, %v672
        %674 = vmatmul.f32.gmra.mxu0 %v673
        %v675 = vpop.f32.mrf.mxu0
        %v676 = vadd.f32 %v556, %v675
        %v677 = vand.u32 %v247, 4294901760
        %v678 = vsub.f32 %v247, %v677
        %679 = vmatmul.f32.gmra.mxu0 %v678
        %v680 = vpop.f32.mrf.mxu0
        %v681 = vadd.f32 %v560, %v680
        %v682 = vand.u32 %v248, 4294901760
        %v683 = vsub.f32 %v248, %v682
        %684 = vmatmul.f32.gmra.mxu0 %v683
        %v685 = vpop.f32.mrf.mxu0
        %v686 = vadd.f32 %v564, %v685
        %v687 = vand.u32 %v249, 4294901760
        %v688 = vsub.f32 %v249, %v687
        %689 = vmatmul.f32.gmra.mxu0 %v688
        %v690 = vpop.f32.mrf.mxu0
        %v691 = vadd.f32 %v568, %v690
        %v692 = vand.u32 %v250, 4294901760
        %v693 = vsub.f32 %v250, %v692
        %694 = vmatmul.f32.gmra.mxu0 %v693
        %v695 = vpop.f32.mrf.mxu0
        %v696 = vadd.f32 %v572, %v695
        %v697 = vand.u32 %v251, 4294901760
        %v698 = vsub.f32 %v251, %v697
        %699 = vmatmul.f32.gmra.mxu0 %v698
        %v700 = vpop.f32.mrf.mxu0
        %v701 = vadd.f32 %v576, %v700
        %v702 = vand.u32 %v252, 4294901760
        %v703 = vsub.f32 %v252, %v702
        %704 = vmatmul.f32.gmra.mxu0 %v703
        %v705 = vpop.f32.mrf.mxu0
        %v706 = vadd.f32 %v580, %v705
        %v707 = vand.u32 %v253, 4294901760
        %v708 = vsub.f32 %v253, %v707
        %709 = vmatmul.f32.gmra.mxu0 %v708
        %v710 = vpop.f32.mrf.mxu0
        %v711 = vadd.f32 %v584, %v710
        %v712 = vand.u32 %v254, 4294901760
        %v713 = vsub.f32 %v254, %v712
        %714 = vmatmul.f32.gmra.mxu0 %v713
        %v715 = vpop.f32.mrf.mxu0
        %v716 = vadd.f32 %v588, %v715
        %v717 = vand.u32 %v255, 4294901760
        %v718 = vsub.f32 %v255, %v717
        %719 = vmatmul.f32.gmra.mxu0 %v718
        %v720 = vpop.f32.mrf.mxu0
        %v721 = vadd.f32 %v592, %v720
        %722 = vdwg.mxu0
        %v723 = vand.u32 %v271, 4294901760
        %724 = vmatpush.msra.mxu0 %v723
        %v725 = vand.u32 %v270, 4294901760
        %726 = vmatpush.msra.mxu0 %v725
        %v727 = vand.u32 %v269, 4294901760
        %728 = vmatpush.msra.mxu0 %v727
        %v729 = vand.u32 %v268, 4294901760
        %730 = vmatpush.msra.mxu0 %v729
        %v731 = vand.u32 %v267, 4294901760
        %732 = vmatpush.msra.mxu0 %v731
        %v733 = vand.u32 %v266, 4294901760
        %734 = vmatpush.msra.mxu0 %v733
        %v735 = vand.u32 %v265, 4294901760
        %736 = vmatpush.msra.mxu0 %v735
        %v737 = vand.u32 %v264, 4294901760
        %738 = vmatpush.msra.mxu0 %v737
        %v739 = vand.u32 %v263, 4294901760
        %740 = vmatpush.msra.mxu0 %v739
        %v741 = vand.u32 %v262, 4294901760
        %742 = vmatpush.msra.mxu0 %v741
        %v743 = vand.u32 %v261, 4294901760
        %744 = vmatpush.msra.mxu0 %v743
        %v745 = vand.u32 %v260, 4294901760
        %746 = vmatpush.msra.mxu0 %v745
        %v747 = vand.u32 %v259, 4294901760
        %748 = vmatpush.msra.mxu0 %v747
        %v749 = vand.u32 %v258, 4294901760
        %750 = vmatpush.msra.mxu0 %v749
        %v751 = vand.u32 %v257, 4294901760
        %752 = vmatpush.msra.mxu0 %v751
        %v753 = vand.u32 %v256, 4294901760
        %754 = vmatpush.msra.mxu0 %v753
        %v755 = vand.u32 %v240, 4294901760
        %v756 = vsub.f32 %v240, %v755
        %v757 = vand.u32 %v756, 4294901760
        %758 = vmatmul.f32.gmra.mxu0 %v757
        %v759 = vpop.f32.mrf.mxu0
        %v760 = vadd.f32 %v646, %v759
        %v761 = vand.u32 %v241, 4294901760
        %v762 = vsub.f32 %v241, %v761
        %v763 = vand.u32 %v762, 4294901760
        %764 = vmatmul.f32.gmra.mxu0 %v763
        %v765 = vpop.f32.mrf.mxu0
        %v766 = vadd.f32 %v651, %v765
        %v767 = vand.u32 %v242, 4294901760
        %v768 = vsub.f32 %v242, %v767
        %v769 = vand.u32 %v768, 4294901760
        %770 = vmatmul.f32.gmra.mxu0 %v769
        %v771 = vpop.f32.mrf.mxu0
        %v772 = vadd.f32 %v656, %v771
        %v773 = vand.u32 %v243, 4294901760
        %v774 = vsub.f32 %v243, %v773
        %v775 = vand.u32 %v774, 4294901760
        %776 = vmatmul.f32.gmra.mxu0 %v775
        %v777 = vpop.f32.mrf.mxu0
        %v778 = vadd.f32 %v661, %v777
        %v779 = vand.u32 %v244, 4294901760
        %v780 = vsub.f32 %v244, %v779
        %v781 = vand.u32 %v780, 4294901760
        %782 = vmatmul.f32.gmra.mxu0 %v781
        %v783 = vpop.f32.mrf.mxu0
        %v784 = vadd.f32 %v666, %v783
        %v785 = vand.u32 %v245, 4294901760
        %v786 = vsub.f32 %v245, %v785
        %v787 = vand.u32 %v786, 4294901760
        %788 = vmatmul.f32.gmra.mxu0 %v787
        %v789 = vpop.f32.mrf.mxu0
        %v790 = vadd.f32 %v671, %v789
        %v791 = vand.u32 %v246, 4294901760
        %v792 = vsub.f32 %v246, %v791
        %v793 = vand.u32 %v792, 4294901760
        %794 = vmatmul.f32.gmra.mxu0 %v793
        %v795 = vpop.f32.mrf.mxu0
        %v796 = vadd.f32 %v676, %v795
        %v797 = vand.u32 %v247, 4294901760
        %v798 = vsub.f32 %v247, %v797
        %v799 = vand.u32 %v798, 4294901760
        %800 = vmatmul.f32.gmra.mxu0 %v799
        %v801 = vpop.f32.mrf.mxu0
        %v802 = vadd.f32 %v681, %v801
        %v803 = vand.u32 %v248, 4294901760
        %v804 = vsub.f32 %v248, %v803
        %v805 = vand.u32 %v804, 4294901760
        %806 = vmatmul.f32.gmra.mxu0 %v805
        %v807 = vpop.f32.mrf.mxu0
        %v808 = vadd.f32 %v686, %v807
        %v809 = vand.u32 %v249, 4294901760
        %v810 = vsub.f32 %v249, %v809
        %v811 = vand.u32 %v810, 4294901760
        %812 = vmatmul.f32.gmra.mxu0 %v811
        %v813 = vpop.f32.mrf.mxu0
        %v814 = vadd.f32 %v691, %v813
        %v815 = vand.u32 %v250, 4294901760
        %v816 = vsub.f32 %v250, %v815
        %v817 = vand.u32 %v816, 4294901760
        %818 = vmatmul.f32.gmra.mxu0 %v817
        %v819 = vpop.f32.mrf.mxu0
        %v820 = vadd.f32 %v696, %v819
        %v821 = vand.u32 %v251, 4294901760
        %v822 = vsub.f32 %v251, %v821
        %v823 = vand.u32 %v822, 4294901760
        %824 = vmatmul.f32.gmra.mxu0 %v823
        %v825 = vpop.f32.mrf.mxu0
        %v826 = vadd.f32 %v701, %v825
        %v827 = vand.u32 %v252, 4294901760
        %v828 = vsub.f32 %v252, %v827
        %v829 = vand.u32 %v828, 4294901760
        %830 = vmatmul.f32.gmra.mxu0 %v829
        %v831 = vpop.f32.mrf.mxu0
        %v832 = vadd.f32 %v706, %v831
        %v833 = vand.u32 %v253, 4294901760
        %v834 = vsub.f32 %v253, %v833
        %v835 = vand.u32 %v834, 4294901760
        %836 = vmatmul.f32.gmra.mxu0 %v835
        %v837 = vpop.f32.mrf.mxu0
        %v838 = vadd.f32 %v711, %v837
        %v839 = vand.u32 %v254, 4294901760
        %v840 = vsub.f32 %v254, %v839
        %v841 = vand.u32 %v840, 4294901760
        %842 = vmatmul.f32.gmra.mxu0 %v841
        %v843 = vpop.f32.mrf.mxu0
        %v844 = vadd.f32 %v716, %v843
        %v845 = vand.u32 %v255, 4294901760
        %v846 = vsub.f32 %v255, %v845
        %v847 = vand.u32 %v846, 4294901760
        %848 = vmatmul.f32.gmra.mxu0 %v847
        %v849 = vpop.f32.mrf.mxu0
        %v850 = vadd.f32 %v721, %v849
        %851 = vdwg.mxu0
        %v852 = vand.u32 %v271, 4294901760
        %v853 = vsub.f32 %v271, %v852
        %v854 = vand.u32 %v853, 4294901760
        %855 = vmatpush.msra.mxu0 %v854
        %v856 = vand.u32 %v270, 4294901760
        %v857 = vsub.f32 %v270, %v856
        %v858 = vand.u32 %v857, 4294901760
        %859 = vmatpush.msra.mxu0 %v858
        %v860 = vand.u32 %v269, 4294901760
        %v861 = vsub.f32 %v269, %v860
        %v862 = vand.u32 %v861, 4294901760
        %863 = vmatpush.msra.mxu0 %v862
        %v864 = vand.u32 %v268, 4294901760
        %v865 = vsub.f32 %v268, %v864
        %v866 = vand.u32 %v865, 4294901760
        %867 = vmatpush.msra.mxu0 %v866
        %v868 = vand.u32 %v267, 4294901760
        %v869 = vsub.f32 %v267, %v868
        %v870 = vand.u32 %v869, 4294901760
        %871 = vmatpush.msra.mxu0 %v870
        %v872 = vand.u32 %v266, 4294901760
        %v873 = vsub.f32 %v266, %v872
        %v874 = vand.u32 %v873, 4294901760
        %875 = vmatpush.msra.mxu0 %v874
        %v876 = vand.u32 %v265, 4294901760
        %v877 = vsub.f32 %v265, %v876
        %v878 = vand.u32 %v877, 4294901760
        %879 = vmatpush.msra.mxu0 %v878
        %v880 = vand.u32 %v264, 4294901760
        %v881 = vsub.f32 %v264, %v880
        %v882 = vand.u32 %v881, 4294901760
        %883 = vmatpush.msra.mxu0 %v882
        %v884 = vand.u32 %v263, 4294901760
        %v885 = vsub.f32 %v263, %v884
        %v886 = vand.u32 %v885, 4294901760
        %887 = vmatpush.msra.mxu0 %v886
        %v888 = vand.u32 %v262, 4294901760
        %v889 = vsub.f32 %v262, %v888
        %v890 = vand.u32 %v889, 4294901760
        %891 = vmatpush.msra.mxu0 %v890
        %v892 = vand.u32 %v261, 4294901760
        %v893 = vsub.f32 %v261, %v892
        %v894 = vand.u32 %v893, 4294901760
        %895 = vmatpush.msra.mxu0 %v894
        %v896 = vand.u32 %v260, 4294901760
        %v897 = vsub.f32 %v260, %v896
        %v898 = vand.u32 %v897, 4294901760
        %899 = vmatpush.msra.mxu0 %v898
        %v900 = vand.u32 %v259, 4294901760
        %v901 = vsub.f32 %v259, %v900
        %v902 = vand.u32 %v901, 4294901760
        %903 = vmatpush.msra.mxu0 %v902
        %v904 = vand.u32 %v258, 4294901760
        %v905 = vsub.f32 %v258, %v904
        %v906 = vand.u32 %v905, 4294901760
        %907 = vmatpush.msra.mxu0 %v906
        %v908 = vand.u32 %v257, 4294901760
        %v909 = vsub.f32 %v257, %v908
        %v910 = vand.u32 %v909, 4294901760
        %911 = vmatpush.msra.mxu0 %v910
        %v912 = vand.u32 %v256, 4294901760
        %v913 = vsub.f32 %v256, %v912
        %v914 = vand.u32 %v913, 4294901760
        %915 = vmatpush.msra.mxu0 %v914
        %v916 = vand.u32 %v240, 4294901760
        %917 = vmatmul.f32.gmra.mxu0 %v916
        %v918 = vpop.f32.mrf.mxu0
        %v919 = vadd.f32 %v760, %v918
        %v920 = vand.u32 %v241, 4294901760
        %921 = vmatmul.f32.gmra.mxu0 %v920
        %v922 = vpop.f32.mrf.mxu0
        %v923 = vadd.f32 %v766, %v922
        %v924 = vand.u32 %v242, 4294901760
        %925 = vmatmul.f32.gmra.mxu0 %v924
        %v926 = vpop.f32.mrf.mxu0
        %v927 = vadd.f32 %v772, %v926
        %v928 = vand.u32 %v243, 4294901760
        %929 = vmatmul.f32.gmra.mxu0 %v928
        %v930 = vpop.f32.mrf.mxu0
        %v931 = vadd.f32 %v778, %v930
        %v932 = vand.u32 %v244, 4294901760
        %933 = vmatmul.f32.gmra.mxu0 %v932
        %v934 = vpop.f32.mrf.mxu0
        %v935 = vadd.f32 %v784, %v934
        %v936 = vand.u32 %v245, 4294901760
        %937 = vmatmul.f32.gmra.mxu0 %v936
        %v938 = vpop.f32.mrf.mxu0
        %v939 = vadd.f32 %v790, %v938
        %v940 = vand.u32 %v246, 4294901760
        %941 = vmatmul.f32.gmra.mxu0 %v940
        %v942 = vpop.f32.mrf.mxu0
        %v943 = vadd.f32 %v796, %v942
        %v944 = vand.u32 %v247, 4294901760
        %945 = vmatmul.f32.gmra.mxu0 %v944
        %v946 = vpop.f32.mrf.mxu0
        %v947 = vadd.f32 %v802, %v946
        %v948 = vand.u32 %v248, 4294901760
        %949 = vmatmul.f32.gmra.mxu0 %v948
        %v950 = vpop.f32.mrf.mxu0
        %v951 = vadd.f32 %v808, %v950
        %v952 = vand.u32 %v249, 4294901760
        %953 = vmatmul.f32.gmra.mxu0 %v952
        %v954 = vpop.f32.mrf.mxu0
        %v955 = vadd.f32 %v814, %v954
        %v956 = vand.u32 %v250, 4294901760
        %957 = vmatmul.f32.gmra.mxu0 %v956
        %v958 = vpop.f32.mrf.mxu0
        %v959 = vadd.f32 %v820, %v958
        %v960 = vand.u32 %v251, 4294901760
        %961 = vmatmul.f32.gmra.mxu0 %v960
        %v962 = vpop.f32.mrf.mxu0
        %v963 = vadd.f32 %v826, %v962
        %v964 = vand.u32 %v252, 4294901760
        %965 = vmatmul.f32.gmra.mxu0 %v964
        %v966 = vpop.f32.mrf.mxu0
        %v967 = vadd.f32 %v832, %v966
        %v968 = vand.u32 %v253, 4294901760
        %969 = vmatmul.f32.gmra.mxu0 %v968
        %v970 = vpop.f32.mrf.mxu0
        %v971 = vadd.f32 %v838, %v970
        %v972 = vand.u32 %v254, 4294901760
        %973 = vmatmul.f32.gmra.mxu0 %v972
        %v974 = vpop.f32.mrf.mxu0
        %v975 = vadd.f32 %v844, %v974
        %v976 = vand.u32 %v255, 4294901760
        %977 = vmatmul.f32.gmra.mxu0 %v976
        %v978 = vpop.f32.mrf.mxu0
        %v979 = vadd.f32 %v850, %v978
        %980 = vdwg.mxu0
        %v981 = vand.u32 %v271, 4294901760
        %982 = vmatpush.msra.mxu0 %v981
        %v983 = vand.u32 %v270, 4294901760
        %984 = vmatpush.msra.mxu0 %v983
        %v985 = vand.u32 %v269, 4294901760
        %986 = vmatpush.msra.mxu0 %v985
        %v987 = vand.u32 %v268, 4294901760
        %988 = vmatpush.msra.mxu0 %v987
        %v989 = vand.u32 %v267, 4294901760
        %990 = vmatpush.msra.mxu0 %v989
        %v991 = vand.u32 %v266, 4294901760
        %992 = vmatpush.msra.mxu0 %v991
        %v993 = vand.u32 %v265, 4294901760
        %994 = vmatpush.msra.mxu0 %v993
        %v995 = vand.u32 %v264, 4294901760
        %996 = vmatpush.msra.mxu0 %v995
        %v997 = vand.u32 %v263, 4294901760
        %998 = vmatpush.msra.mxu0 %v997
        %v999 = vand.u32 %v262, 4294901760
        %1000 = vmatpush.msra.mxu0 %v999
        %v1001 = vand.u32 %v261, 4294901760
        %1002 = vmatpush.msra.mxu0 %v1001
        %v1003 = vand.u32 %v260, 4294901760
        %1004 = vmatpush.msra.mxu0 %v1003
        %v1005 = vand.u32 %v259, 4294901760
        %1006 = vmatpush.msra.mxu0 %v1005
        %v1007 = vand.u32 %v258, 4294901760
        %1008 = vmatpush.msra.mxu0 %v1007
        %v1009 = vand.u32 %v257, 4294901760
        %1010 = vmatpush.msra.mxu0 %v1009
        %v1011 = vand.u32 %v256, 4294901760
        %1012 = vmatpush.msra.mxu0 %v1011
        %v1013 = vand.u32 %v240, 4294901760
        %1014 = vmatmul.f32.gmra.mxu0 %v1013
        %v1015 = vpop.f32.mrf.mxu0
        %v1016 = vadd.f32 %v919, %v1015
        %v1017 = vand.u32 %v241, 4294901760
        %1018 = vmatmul.f32.gmra.mxu0 %v1017
        %v1019 = vpop.f32.mrf.mxu0
        %v1020 = vadd.f32 %v923, %v1019
        %v1021 = vand.u32 %v242, 4294901760
        %1022 = vmatmul.f32.gmra.mxu0 %v1021
        %v1023 = vpop.f32.mrf.mxu0
        %v1024 = vadd.f32 %v927, %v1023
        %v1025 = vand.u32 %v243, 4294901760
        %1026 = vmatmul.f32.gmra.mxu0 %v1025
        %v1027 = vpop.f32.mrf.mxu0
        %v1028 = vadd.f32 %v931, %v1027
        %v1029 = vand.u32 %v244, 4294901760
        %1030 = vmatmul.f32.gmra.mxu0 %v1029
        %v1031 = vpop.f32.mrf.mxu0
        %v1032 = vadd.f32 %v935, %v1031
        %v1033 = vand.u32 %v245, 4294901760
        %1034 = vmatmul.f32.gmra.mxu0 %v1033
        %v1035 = vpop.f32.mrf.mxu0
        %v1036 = vadd.f32 %v939, %v1035
        %v1037 = vand.u32 %v246, 4294901760
        %1038 = vmatmul.f32.gmra.mxu0 %v1037
        %v1039 = vpop.f32.mrf.mxu0
        %v1040 = vadd.f32 %v943, %v1039
        %v1041 = vand.u32 %v247, 4294901760
        %1042 = vmatmul.f32.gmra.mxu0 %v1041
        %v1043 = vpop.f32.mrf.mxu0
        %v1044 = vadd.f32 %v947, %v1043
        %v1045 = vand.u32 %v248, 4294901760
        %1046 = vmatmul.f32.gmra.mxu0 %v1045
        %v1047 = vpop.f32.mrf.mxu0
        %v1048 = vadd.f32 %v951, %v1047
        %v1049 = vand.u32 %v249, 4294901760
        %1050 = vmatmul.f32.gmra.mxu0 %v1049
        %v1051 = vpop.f32.mrf.mxu0
        %v1052 = vadd.f32 %v955, %v1051
        %v1053 = vand.u32 %v250, 4294901760
        %1054 = vmatmul.f32.gmra.mxu0 %v1053
        %v1055 = vpop.f32.mrf.mxu0
        %v1056 = vadd.f32 %v959, %v1055
        %v1057 = vand.u32 %v251, 4294901760
        %1058 = vmatmul.f32.gmra.mxu0 %v1057
        %v1059 = vpop.f32.mrf.mxu0
        %v1060 = vadd.f32 %v963, %v1059
        %v1061 = vand.u32 %v252, 4294901760
        %1062 = vmatmul.f32.gmra.mxu0 %v1061
        %v1063 = vpop.f32.mrf.mxu0
        %v1064 = vadd.f32 %v967, %v1063
        %v1065 = vand.u32 %v253, 4294901760
        %1066 = vmatmul.f32.gmra.mxu0 %v1065
        %v1067 = vpop.f32.mrf.mxu0
        %v1068 = vadd.f32 %v971, %v1067
        %v1069 = vand.u32 %v254, 4294901760
        %1070 = vmatmul.f32.gmra.mxu0 %v1069
        %v1071 = vpop.f32.mrf.mxu0
        %v1072 = vadd.f32 %v975, %v1071
        %v1073 = vand.u32 %v255, 4294901760
        %1074 = vmatmul.f32.gmra.mxu0 %v1073
        %v1075 = vpop.f32.mrf.mxu0
        %v1076 = vadd.f32 %v979, %v1075
        %1077 = vdwg.mxu0
        %v1078 = vmul.f32 %v1016, 0.03125
        %v1079 = vmul.f32 %v1020, 0.03125
        %v1080 = vmul.f32 %v1024, 0.03125
        %v1081 = vmul.f32 %v1028, 0.03125
        %v1082 = vmul.f32 %v1032, 0.03125
        %v1083 = vmul.f32 %v1036, 0.03125
        %v1084 = vmul.f32 %v1040, 0.03125
        %v1085 = vmul.f32 %v1044, 0.03125
        %v1086 = vmul.f32 %v1048, 0.03125
        %v1087 = vmul.f32 %v1052, 0.03125
        %v1088 = vmul.f32 %v1056, 0.03125
        %v1089 = vmul.f32 %v1060, 0.03125
        %v1090 = vmul.f32 %v1064, 0.03125
        %v1091 = vmul.f32 %v1068, 0.03125
        %v1092 = vmul.f32 %v1072, 0.03125
        %v1093 = vmul.f32 %v1076, 0.03125
        %v1094 = vadd.f32 %v1078, 1e-06
        %v1095 = vadd.f32 %v1079, 1e-06
        %v1096 = vadd.f32 %v1080, 1e-06
        %v1097 = vadd.f32 %v1081, 1e-06
        %v1098 = vadd.f32 %v1082, 1e-06
        %v1099 = vadd.f32 %v1083, 1e-06
        %v1100 = vadd.f32 %v1084, 1e-06
        %v1101 = vadd.f32 %v1085, 1e-06
        %v1102 = vadd.f32 %v1086, 1e-06
        %v1103 = vadd.f32 %v1087, 1e-06
        %v1104 = vadd.f32 %v1088, 1e-06
        %v1105 = vadd.f32 %v1089, 1e-06
        %v1106 = vadd.f32 %v1090, 1e-06
        %v1107 = vadd.f32 %v1091, 1e-06
        %v1108 = vadd.f32 %v1092, 1e-06
        %v1109 = vadd.f32 %v1093, 1e-06
        %v1110 = vrsqrt.pop %v1094
        %v1111 = vmul.f32 %v1110, %v1094
        %v1112 = vmul.f32 %v1111, %v1110
        %v1113 = vmul.f32 0.5, %v1112
        %v1114 = vsub.f32 1.5, %v1113
        %v1115 = vmul.f32 %v1110, %v1114
        %vm1116 = vweird.f32 %v1094
        %vm1117 = vweird.f32 %v1110
        %vm1118 = vmor %vm1116, %vm1117
        %v1119 = vsel %vm1118, %v1110, %v1115
        %v1120 = vrsqrt.pop %v1095
        %v1121 = vmul.f32 %v1120, %v1095
        %v1122 = vmul.f32 %v1121, %v1120
        %v1123 = vmul.f32 0.5, %v1122
        %v1124 = vsub.f32 1.5, %v1123
        %v1125 = vmul.f32 %v1120, %v1124
        %vm1126 = vweird.f32 %v1095
        %vm1127 = vweird.f32 %v1120
        %vm1128 = vmor %vm1126, %vm1127
        %v1129 = vsel %vm1128, %v1120, %v1125
        %v1130 = vrsqrt.pop %v1096
        %v1131 = vmul.f32 %v1130, %v1096
        %v1132 = vmul.f32 %v1131, %v1130
        %v1133 = vmul.f32 0.5, %v1132
        %v1134 = vsub.f32 1.5, %v1133
        %v1135 = vmul.f32 %v1130, %v1134
        %vm1136 = vweird.f32 %v1096
        %vm1137 = vweird.f32 %v1130
        %vm1138 = vmor %vm1136, %vm1137
        %v1139 = vsel %vm1138, %v1130, %v1135
        %v1140 = vrsqrt.pop %v1097
        %v1141 = vmul.f32 %v1140, %v1097
        %v1142 = vmul.f32 %v1141, %v1140
        %v1143 = vmul.f32 0.5, %v1142
        %v1144 = vsub.f32 1.5, %v1143
        %v1145 = vmul.f32 %v1140, %v1144
        %vm1146 = vweird.f32 %v1097
        %vm1147 = vweird.f32 %v1140
        %vm1148 = vmor %vm1146, %vm1147
        %v1149 = vsel %vm1148, %v1140, %v1145
        %v1150 = vrsqrt.pop %v1098
        %v1151 = vmul.f32 %v1150, %v1098
        %v1152 = vmul.f32 %v1151, %v1150
        %v1153 = vmul.f32 0.5, %v1152
        %v1154 = vsub.f32 1.5, %v1153
        %v1155 = vmul.f32 %v1150, %v1154
        %vm1156 = vweird.f32 %v1098
        %vm1157 = vweird.f32 %v1150
        %vm1158 = vmor %vm1156, %vm1157
        %v1159 = vsel %vm1158, %v1150, %v1155
        %v1160 = vrsqrt.pop %v1099
        %v1161 = vmul.f32 %v1160, %v1099
        %v1162 = vmul.f32 %v1161, %v1160
        %v1163 = vmul.f32 0.5, %v1162
        %v1164 = vsub.f32 1.5, %v1163
        %v1165 = vmul.f32 %v1160, %v1164
        %vm1166 = vweird.f32 %v1099
        %vm1167 = vweird.f32 %v1160
        %vm1168 = vmor %vm1166, %vm1167
        %v1169 = vsel %vm1168, %v1160, %v1165
        %v1170 = vrsqrt.pop %v1100
        %v1171 = vmul.f32 %v1170, %v1100
        %v1172 = vmul.f32 %v1171, %v1170
        %v1173 = vmul.f32 0.5, %v1172
        %v1174 = vsub.f32 1.5, %v1173
        %v1175 = vmul.f32 %v1170, %v1174
        %vm1176 = vweird.f32 %v1100
        %vm1177 = vweird.f32 %v1170
        %vm1178 = vmor %vm1176, %vm1177
        %v1179 = vsel %vm1178, %v1170, %v1175
        %v1180 = vrsqrt.pop %v1101
        %v1181 = vmul.f32 %v1180, %v1101
        %v1182 = vmul.f32 %v1181, %v1180
        %v1183 = vmul.f32 0.5, %v1182
        %v1184 = vsub.f32 1.5, %v1183
        %v1185 = vmul.f32 %v1180, %v1184
        %vm1186 = vweird.f32 %v1101
        %vm1187 = vweird.f32 %v1180
        %vm1188 = vmor %vm1186, %vm1187
        %v1189 = vsel %vm1188, %v1180, %v1185
        %v1190 = vrsqrt.pop %v1102
        %v1191 = vmul.f32 %v1190, %v1102
        %v1192 = vmul.f32 %v1191, %v1190
        %v1193 = vmul.f32 0.5, %v1192
        %v1194 = vsub.f32 1.5, %v1193
        %v1195 = vmul.f32 %v1190, %v1194
        %vm1196 = vweird.f32 %v1102
        %vm1197 = vweird.f32 %v1190
        %vm1198 = vmor %vm1196, %vm1197
        %v1199 = vsel %vm1198, %v1190, %v1195
        %v1200 = vrsqrt.pop %v1103
        %v1201 = vmul.f32 %v1200, %v1103
        %v1202 = vmul.f32 %v1201, %v1200
        %v1203 = vmul.f32 0.5, %v1202
        %v1204 = vsub.f32 1.5, %v1203
        %v1205 = vmul.f32 %v1200, %v1204
        %vm1206 = vweird.f32 %v1103
        %vm1207 = vweird.f32 %v1200
        %vm1208 = vmor %vm1206, %vm1207
        %v1209 = vsel %vm1208, %v1200, %v1205
        %v1210 = vrsqrt.pop %v1104
        %v1211 = vmul.f32 %v1210, %v1104
        %v1212 = vmul.f32 %v1211, %v1210
        %v1213 = vmul.f32 0.5, %v1212
        %v1214 = vsub.f32 1.5, %v1213
        %v1215 = vmul.f32 %v1210, %v1214
        %vm1216 = vweird.f32 %v1104
        %vm1217 = vweird.f32 %v1210
        %vm1218 = vmor %vm1216, %vm1217
        %v1219 = vsel %vm1218, %v1210, %v1215
        %v1220 = vrsqrt.pop %v1105
        %v1221 = vmul.f32 %v1220, %v1105
        %v1222 = vmul.f32 %v1221, %v1220
        %v1223 = vmul.f32 0.5, %v1222
        %v1224 = vsub.f32 1.5, %v1223
        %v1225 = vmul.f32 %v1220, %v1224
        %vm1226 = vweird.f32 %v1105
        %vm1227 = vweird.f32 %v1220
        %vm1228 = vmor %vm1226, %vm1227
        %v1229 = vsel %vm1228, %v1220, %v1225
        %v1230 = vrsqrt.pop %v1106
        %v1231 = vmul.f32 %v1230, %v1106
        %v1232 = vmul.f32 %v1231, %v1230
        %v1233 = vmul.f32 0.5, %v1232
        %v1234 = vsub.f32 1.5, %v1233
        %v1235 = vmul.f32 %v1230, %v1234
        %vm1236 = vweird.f32 %v1106
        %vm1237 = vweird.f32 %v1230
        %vm1238 = vmor %vm1236, %vm1237
        %v1239 = vsel %vm1238, %v1230, %v1235
        %v1240 = vrsqrt.pop %v1107
        %v1241 = vmul.f32 %v1240, %v1107
        %v1242 = vmul.f32 %v1241, %v1240
        %v1243 = vmul.f32 0.5, %v1242
        %v1244 = vsub.f32 1.5, %v1243
        %v1245 = vmul.f32 %v1240, %v1244
        %vm1246 = vweird.f32 %v1107
        %vm1247 = vweird.f32 %v1240
        %vm1248 = vmor %vm1246, %vm1247
        %v1249 = vsel %vm1248, %v1240, %v1245
        %v1250 = vrsqrt.pop %v1108
        %v1251 = vmul.f32 %v1250, %v1108
        %v1252 = vmul.f32 %v1251, %v1250
        %v1253 = vmul.f32 0.5, %v1252
        %v1254 = vsub.f32 1.5, %v1253
        %v1255 = vmul.f32 %v1250, %v1254
        %vm1256 = vweird.f32 %v1108
        %vm1257 = vweird.f32 %v1250
        %vm1258 = vmor %vm1256, %vm1257
        %v1259 = vsel %vm1258, %v1250, %v1255
        %v1260 = vrsqrt.pop %v1109
        %v1261 = vmul.f32 %v1260, %v1109
        %v1262 = vmul.f32 %v1261, %v1260
        %v1263 = vmul.f32 0.5, %v1262
        %v1264 = vsub.f32 1.5, %v1263
        %v1265 = vmul.f32 %v1260, %v1264
        %vm1266 = vweird.f32 %v1109
        %vm1267 = vweird.f32 %v1260
        %vm1268 = vmor %vm1266, %vm1267
        %v1269 = vsel %vm1268, %v1260, %v1265
        %v1270 = vld [vmem:[#allocation5] sm:$0x1]
        %v1271 = vmul.f32 %v224, %v1119
        %v1272 = vmul.f32 %v225, %v1129
        %v1273 = vmul.f32 %v226, %v1139
        %v1274 = vmul.f32 %v227, %v1149
        %v1275 = vmul.f32 %v228, %v1159
        %v1276 = vmul.f32 %v229, %v1169
        %v1277 = vmul.f32 %v230, %v1179
        %v1278 = vmul.f32 %v231, %v1189
        %v1279 = vmul.f32 %v232, %v1199
        %v1280 = vmul.f32 %v233, %v1209
        %v1281 = vmul.f32 %v234, %v1219
        %v1282 = vmul.f32 %v235, %v1229
        %v1283 = vmul.f32 %v236, %v1239
        %v1284 = vmul.f32 %v237, %v1249
        %v1285 = vmul.f32 %v238, %v1259
        %v1286 = vmul.f32 %v239, %v1269
        %v1288 = vperm.slane %v1270, 0
        %v1290 = vmul.f32 %v1288, %v1271
        %v1291 = vmul.f32 %v1288, %v1272
        %v1292 = vmul.f32 %v1288, %v1273
        %v1293 = vmul.f32 %v1288, %v1274
        %v1294 = vmul.f32 %v1288, %v1275
        %v1295 = vmul.f32 %v1288, %v1276
        %v1296 = vmul.f32 %v1288, %v1277
        %v1297 = vmul.f32 %v1288, %v1278
        %v1298 = vmul.f32 %v1288, %v1279
        %v1299 = vmul.f32 %v1288, %v1280
        %v1300 = vmul.f32 %v1288, %v1281
        %v1301 = vmul.f32 %v1288, %v1282
        %v1302 = vmul.f32 %v1288, %v1283
        %v1303 = vmul.f32 %v1288, %v1284
        %v1304 = vmul.f32 %v1288, %v1285
        %v1305 = vmul.f32 %v1288, %v1286
        %1306 = vst [vmem:[%s221] sm:$0xff] %v1290
        %1307 = vst [vmem:[%s221 + $0x8] sm:$0xff] %v1291
        %1308 = vst [vmem:[%s221 + $0x10] sm:$0xff] %v1292
        %1309 = vst [vmem:[%s221 + $0x18] sm:$0xff] %v1293
        %1310 = vst [vmem:[%s221 + $0x20] sm:$0xff] %v1294
        %1311 = vst [vmem:[%s221 + $0x28] sm:$0xff] %v1295
        %1312 = vst [vmem:[%s221 + $0x30] sm:$0xff] %v1296
        %1313 = vst [vmem:[%s221 + $0x38] sm:$0xff] %v1297
        %1314 = vst [vmem:[%s221 + $0x40] sm:$0xff] %v1298
        %1315 = vst [vmem:[%s221 + $0x48] sm:$0xff] %v1299
        %1316 = vst [vmem:[%s221 + $0x50] sm:$0xff] %v1300
        %1317 = vst [vmem:[%s221 + $0x58] sm:$0xff] %v1301
        %1318 = vst [vmem:[%s221 + $0x60] sm:$0xff] %v1302
        %1319 = vst [vmem:[%s221 + $0x68] sm:$0xff] %v1303
        %1320 = vst [vmem:[%s221 + $0x70] sm:$0xff] %v1304
        %1321 = vst [vmem:[%s221 + $0x78] sm:$0xff] %v1305
        %s1322 = sand.u32 %s97, 1
        %s1323 = scalar_lea.sflag [#allocation4], %s1322
        %s1324 = sand.u32 %s97, 1
        %s1325 = smul.addr %s1324, 128
        %s1326 = scalar_lea.vmem [#allocation8], %s1325
        // Predicated region
        $region45: #{tpu_custom_call.1} parent=31 // pred_check
          %p1327 = pneg %p107
        $region46: #{tpu_custom_call.1} parent=31 // pred_check_branch
          %1329 = sbr.rel (%p1327) target = $region48
        $region47: #{tpu_custom_call.1} parent=31 // pred_region
          %s1330 = smul.u32 16, %s21
          %1332 = vsyncadd %s1323, 0
          %s1333 = smul.addr %s1330, 8
          %s1334 = scalar_lea.hbm %s3, %s1333
          %s1335 = sshll.u32 %s1326, 4
          %s1336 = int_to_ptr.vmem [resolvable:$true] %s1335
          %s1337 = sshll.u32 %s1334, 4
          %s1338 = int_to_ptr.hbm [resolvable:$true] %s1337
          %1343 = dma.vmem_to_hbm [thread:$0]  %s1336, 2048, %s1338, %s1323, 128, 128, 8
        $region48: #{tpu_custom_call.1} parent=31 // pred_fallthru
          _
      $region32: #{tpu_custom_call.1} parent=5 // pred_fallthru
        _
      %p1344 = scmp.le.s32.totalorder 2, %s16
      // Predicated region
      $region49: #{tpu_custom_call.1} parent=5 // pred_check
        %p1345 = pneg %p1344
      $region50: #{tpu_custom_call.1} parent=5 // pred_check_branch
        %1347 = sbr.rel (%p1345) target = $region52
      $region51: #{tpu_custom_call.1} parent=5 // pred_region
        %s1348 = ssub.s32 %s16, 2
        // Predicated region
        $region53: #{tpu_custom_call.1} parent=51 // pred_check
          %p1349 = pneg %p113
        $region54: #{tpu_custom_call.1} parent=51 // pred_check_branch
          %1351 = sbr.rel (%p1349) target = $region56
        $region55: #{tpu_custom_call.1} parent=51 // pred_region
          %s1352 = sand.u32 %s98, 1
          %s1353 = scalar_lea.sflag [#allocation4], %s1352
          %s1354 = sand.u32 %s98, 1
          %s1355 = smul.addr %s1354, 128
          %s1356 = scalar_lea.vmem [#allocation8], %s1355
          %1358 = dma.done %s1353, 2048
        $region56: #{tpu_custom_call.1} parent=51 // pred_fallthru
          _
      $region52: #{tpu_custom_call.1} parent=5 // pred_fallthru
        _
    $region6: #{tpu_custom_call.1} parent=1 // loop_footer
      %s20 = sadd.s32 1, %s16
    $region7: #{tpu_custom_call.1} parent=1 // loop_footer_branch
      %15 = sbr.rel target = $region3
    $region8: #{tpu_custom_call.1} parent=1 // loop_exit
      _
    %1359 = vsyncpa [#allocation3], 1
    %s1360 = scalar_lea.sflag [#allocation3], 1
    %1361 = vsyncpa %s1360, 1
    %1362 = vsyncpa [#allocation6], 1
    %1363 = vsyncpa [#allocation4], 1
    %s1364 = scalar_lea.sflag [#allocation4], 1
    %1365 = vsyncpa %s1364, 1

</llo_original>
